<compile_context>
chip_gen: v6e
topology: v6e:2x2x1
jax: 0.10.0
libtpu: 0.0.40
codegen_flags: <defaults>
</compile_context>

<pallas_src>
import jax
import jax.numpy as jnp
from jax.experimental import pallas as pl
from jax.experimental.pallas import tpu as pltpu

IN_FEATURES = 4096
OUT_FEATURES = 2
BLOCK_N = 512          # batch tile: 512*4096*4B = 8 MiB per buffer
K_CHUNK = 512          # K walked in 8 chunks; each chunk reused for both cols

assert IN_FEATURES % K_CHUNK == 0


def _ins_d_kernel(x_ref, w_ref, b_ref, o_ref):
    tn = x_ref.shape[0]
    acc0 = jnp.zeros((tn, 1), jnp.float32)
    acc1 = jnp.zeros((tn, 1), jnp.float32)

    # Fused single traversal of x: each K-chunk is loaded once and consumed by
    # both output columns (halves vld traffic vs. two independent full-K sums
    # and avoids (tn, 4096) product temporaries in VMEM).
    for c in range(IN_FEATURES // K_CHUNK):
        lo, hi = c * K_CHUNK, (c + 1) * K_CHUNK
        xc = x_ref[:, lo:hi]                                        # (tn, Kc)
        acc0 = acc0 + jnp.sum(xc * w_ref[0:1, lo:hi], axis=-1, keepdims=True)
        acc1 = acc1 + jnp.sum(xc * w_ref[1:2, lo:hi], axis=-1, keepdims=True)

    # Bias lives in SMEM: two scalar reads, no per-step VMEM broadcast.
    o_ref[:, 0:1] = (acc0 + b_ref[0]).astype(o_ref.dtype)
    o_ref[:, 1:2] = (acc1 + b_ref[1]).astype(o_ref.dtype)


def _choose_tile(n, block_n):
    """Pick the batch tile size.

    Large batches use block_n.  For batches that would otherwise fit in a
    single block, shrink the tile (sublane-aligned) so the grid has >= 2 steps
    and both of v7x's TensorCores get work; v5e/v6e (1 TC) are unaffected.
    """
    if n > block_n:
        return block_n
    half = -(-n // 2)                       # cdiv(n, 2)
    half_aligned = ((half + 7) // 8) * 8    # keep BlockSpec (8, 128) rule
    return min(n, half_aligned)             # either == n or a multiple of 8


def ins_d_forward(x, w, b, *, block_n=BLOCK_N):
    """Forward of Ins_D.  x: (N, 4096), w: (2, 4096), b: (2,)  ->  (N, 2)."""
    n, k = x.shape
    o, kw_ = w.shape
    assert k == IN_FEATURES and kw_ == IN_FEATURES and o == OUT_FEATURES
    assert b.shape == (o,)

    tn = _choose_tile(n, block_n)
    grid = (pl.cdiv(n, tn),)

    cost = pl.CostEstimate(
        flops=2 * n * IN_FEATURES * OUT_FEATURES,
        transcendentals=0,
        bytes_accessed=(n * IN_FEATURES + OUT_FEATURES * IN_FEATURES
                        + n * OUT_FEATURES) * x.dtype.itemsize,
    )

    return pl.pallas_call(
        _ins_d_kernel,
        out_shape=jax.ShapeDtypeStruct((n, o), x.dtype),
        grid=grid,
        in_specs=[
            pl.BlockSpec((tn, k), lambda i: (i, 0)),          # x: tile batch
            pl.BlockSpec((o, k), lambda i: (0, 0)),           # w: resident
            pl.BlockSpec(memory_space=pltpu.MemorySpace.SMEM),  # bias scalars
        ],
        out_specs=pl.BlockSpec((tn, o), lambda i: (i, 0)),
        compiler_params=pltpu.CompilerParams(
            dimension_semantics=("parallel",),    # batch rows independent
            vmem_limit_bytes=32 * 1024 * 1024,    # safe on v5e/v6e/v7x
        ),
        cost_estimate=cost,
    )(x, w, b)


if __name__ == "__main__":
    key = jax.random.PRNGKey(0)
    kx, kw, kb = jax.random.split(key, 3)

    batch = 8
    x = jax.random.normal(kx, (batch, IN_FEATURES), dtype=jnp.float32)

    # Mimic nn.Linear's uniform(-1/sqrt(K), 1/sqrt(K)) init, deterministically.
    bound = 1.0 / (IN_FEATURES ** 0.5)
    w = jax.random.uniform(kw, (OUT_FEATURES, IN_FEATURES),
                           minval=-bound, maxval=bound, dtype=jnp.float32)
    b = jax.random.uniform(kb, (OUT_FEATURES,),
                           minval=-bound, maxval=bound, dtype=jnp.float32)

    out = jax.block_until_ready(ins_d_forward(x, w, b))

    # Reference check in plain JAX.
    ref = x @ w.T + b
    assert out.shape == (batch, OUT_FEATURES)
    assert jnp.allclose(out, ref, atol=1e-4, rtol=1e-4)

    print("KERNEL_OK")
</pallas_src>

<mosaic_0001>
module attributes {stable_mosaic.version = 11 : i64} {
  func.func @_ins_d_kernel(%arg0: i32, %arg1: memref<8x4096xf32, #tpu.memory_space<vmem>>, %arg2: memref<2x4096xf32, #tpu.memory_space<vmem>>, %arg3: memref<2xf32, #tpu.memory_space<smem>>, %arg4: memref<8x2xf32, #tpu.memory_space<vmem>>) attributes {dimension_semantics = [#tpu.dimension_semantics<parallel>], iteration_bounds = array<i64: 1>, scalar_prefetch = 0 : i64, scratch_operands = 0 : i64, tpu.core_type = #tpu.core_type<tc>, window_params = [{transform_indices = @transform_0, window_bounds = array<i64: 8, 4096>}, {pipeline_mode = #tpu.pipeline_mode<synchronous>, transform_indices = @transform_1, window_bounds = array<i64: 2, 4096>}, {transform_indices = @transform_2, window_bounds = array<i64: 2>}, {transform_indices = @transform_3, window_bounds = array<i64: 8, 2>}]} {
    %cst = arith.constant 0.000000e+00 : f32
    %0 = vector.broadcast %cst : f32 to vector<8x1xf32>
    %cst_0 = arith.constant 0.000000e+00 : f32
    %1 = vector.broadcast %cst_0 : f32 to vector<8x1xf32>
    %c0 = arith.constant 0 : index
    %c0_1 = arith.constant 0 : index
    %2 = vector.load %arg1[%c0, %c0_1] : memref<8x4096xf32, #tpu.memory_space<vmem>>, vector<8x512xf32>
    %c0_2 = arith.constant 0 : index
    %c0_3 = arith.constant 0 : index
    %3 = vector.load %arg2[%c0_2, %c0_3] : memref<2x4096xf32, #tpu.memory_space<vmem>>, vector<1x512xf32>
    %4 = vector.broadcast %3 : vector<1x512xf32> to vector<8x512xf32>
    %5 = arith.mulf %2, %4 : vector<8x512xf32>
    %cst_4 = arith.constant dense<0.000000e+00> : vector<8xf32>
    %6 = vector.multi_reduction <add>, %5, %cst_4 [1] : vector<8x512xf32> to vector<8xf32>
    %7 = vector.shape_cast %6 : vector<8xf32> to vector<8x1xf32>
    %8 = arith.addf %0, %7 : vector<8x1xf32>
    %c1 = arith.constant 1 : index
    %c0_5 = arith.constant 0 : index
    %9 = vector.load %arg2[%c1, %c0_5] : memref<2x4096xf32, #tpu.memory_space<vmem>>, vector<1x512xf32>
    %10 = vector.broadcast %9 : vector<1x512xf32> to vector<8x512xf32>
    %11 = arith.mulf %2, %10 : vector<8x512xf32>
    %cst_6 = arith.constant dense<0.000000e+00> : vector<8xf32>
    %12 = vector.multi_reduction <add>, %11, %cst_6 [1] : vector<8x512xf32> to vector<8xf32>
    %13 = vector.shape_cast %12 : vector<8xf32> to vector<8x1xf32>
    %14 = arith.addf %1, %13 : vector<8x1xf32>
    %c0_7 = arith.constant 0 : index
    %c512 = arith.constant 512 : index
    %15 = vector.load %arg1[%c0_7, %c512] : memref<8x4096xf32, #tpu.memory_space<vmem>>, vector<8x512xf32>
    %c0_8 = arith.constant 0 : index
    %c512_9 = arith.constant 512 : index
    %16 = vector.load %arg2[%c0_8, %c512_9] : memref<2x4096xf32, #tpu.memory_space<vmem>>, vector<1x512xf32>
    %17 = vector.broadcast %16 : vector<1x512xf32> to vector<8x512xf32>
    %18 = arith.mulf %15, %17 : vector<8x512xf32>
    %cst_10 = arith.constant dense<0.000000e+00> : vector<8xf32>
    %19 = vector.multi_reduction <add>, %18, %cst_10 [1] : vector<8x512xf32> to vector<8xf32>
    %20 = vector.shape_cast %19 : vector<8xf32> to vector<8x1xf32>
    %21 = arith.addf %8, %20 : vector<8x1xf32>
    %c1_11 = arith.constant 1 : index
    %c512_12 = arith.constant 512 : index
    %22 = vector.load %arg2[%c1_11, %c512_12] : memref<2x4096xf32, #tpu.memory_space<vmem>>, vector<1x512xf32>
    %23 = vector.broadcast %22 : vector<1x512xf32> to vector<8x512xf32>
    %24 = arith.mulf %15, %23 : vector<8x512xf32>
    %cst_13 = arith.constant dense<0.000000e+00> : vector<8xf32>
    %25 = vector.multi_reduction <add>, %24, %cst_13 [1] : vector<8x512xf32> to vector<8xf32>
    %26 = vector.shape_cast %25 : vector<8xf32> to vector<8x1xf32>
    %27 = arith.addf %14, %26 : vector<8x1xf32>
    %c0_14 = arith.constant 0 : index
    %c1024 = arith.constant 1024 : index
    %28 = vector.load %arg1[%c0_14, %c1024] : memref<8x4096xf32, #tpu.memory_space<vmem>>, vector<8x512xf32>
    %c0_15 = arith.constant 0 : index
    %c1024_16 = arith.constant 1024 : index
    %29 = vector.load %arg2[%c0_15, %c1024_16] : memref<2x4096xf32, #tpu.memory_space<vmem>>, vector<1x512xf32>
    %30 = vector.broadcast %29 : vector<1x512xf32> to vector<8x512xf32>
    %31 = arith.mulf %28, %30 : vector<8x512xf32>
    %cst_17 = arith.constant dense<0.000000e+00> : vector<8xf32>
    %32 = vector.multi_reduction <add>, %31, %cst_17 [1] : vector<8x512xf32> to vector<8xf32>
    %33 = vector.shape_cast %32 : vector<8xf32> to vector<8x1xf32>
    %34 = arith.addf %21, %33 : vector<8x1xf32>
    %c1_18 = arith.constant 1 : index
    %c1024_19 = arith.constant 1024 : index
    %35 = vector.load %arg2[%c1_18, %c1024_19] : memref<2x4096xf32, #tpu.memory_space<vmem>>, vector<1x512xf32>
    %36 = vector.broadcast %35 : vector<1x512xf32> to vector<8x512xf32>
    %37 = arith.mulf %28, %36 : vector<8x512xf32>
    %cst_20 = arith.constant dense<0.000000e+00> : vector<8xf32>
    %38 = vector.multi_reduction <add>, %37, %cst_20 [1] : vector<8x512xf32> to vector<8xf32>
    %39 = vector.shape_cast %38 : vector<8xf32> to vector<8x1xf32>
    %40 = arith.addf %27, %39 : vector<8x1xf32>
    %c0_21 = arith.constant 0 : index
    %c1536 = arith.constant 1536 : index
    %41 = vector.load %arg1[%c0_21, %c1536] : memref<8x4096xf32, #tpu.memory_space<vmem>>, vector<8x512xf32>
    %c0_22 = arith.constant 0 : index
    %c1536_23 = arith.constant 1536 : index
    %42 = vector.load %arg2[%c0_22, %c1536_23] : memref<2x4096xf32, #tpu.memory_space<vmem>>, vector<1x512xf32>
    %43 = vector.broadcast %42 : vector<1x512xf32> to vector<8x512xf32>
    %44 = arith.mulf %41, %43 : vector<8x512xf32>
    %cst_24 = arith.constant dense<0.000000e+00> : vector<8xf32>
    %45 = vector.multi_reduction <add>, %44, %cst_24 [1] : vector<8x512xf32> to vector<8xf32>
    %46 = vector.shape_cast %45 : vector<8xf32> to vector<8x1xf32>
    %47 = arith.addf %34, %46 : vector<8x1xf32>
    %c1_25 = arith.constant 1 : index
    %c1536_26 = arith.constant 1536 : index
    %48 = vector.load %arg2[%c1_25, %c1536_26] : memref<2x4096xf32, #tpu.memory_space<vmem>>, vector<1x512xf32>
    %49 = vector.broadcast %48 : vector<1x512xf32> to vector<8x512xf32>
    %50 = arith.mulf %41, %49 : vector<8x512xf32>
    %cst_27 = arith.constant dense<0.000000e+00> : vector<8xf32>
    %51 = vector.multi_reduction <add>, %50, %cst_27 [1] : vector<8x512xf32> to vector<8xf32>
    %52 = vector.shape_cast %51 : vector<8xf32> to vector<8x1xf32>
    %53 = arith.addf %40, %52 : vector<8x1xf32>
    %c0_28 = arith.constant 0 : index
    %c2048 = arith.constant 2048 : index
    %54 = vector.load %arg1[%c0_28, %c2048] : memref<8x4096xf32, #tpu.memory_space<vmem>>, vector<8x512xf32>
    %c0_29 = arith.constant 0 : index
    %c2048_30 = arith.constant 2048 : index
    %55 = vector.load %arg2[%c0_29, %c2048_30] : memref<2x4096xf32, #tpu.memory_space<vmem>>, vector<1x512xf32>
    %56 = vector.broadcast %55 : vector<1x512xf32> to vector<8x512xf32>
    %57 = arith.mulf %54, %56 : vector<8x512xf32>
    %cst_31 = arith.constant dense<0.000000e+00> : vector<8xf32>
    %58 = vector.multi_reduction <add>, %57, %cst_31 [1] : vector<8x512xf32> to vector<8xf32>
    %59 = vector.shape_cast %58 : vector<8xf32> to vector<8x1xf32>
    %60 = arith.addf %47, %59 : vector<8x1xf32>
    %c1_32 = arith.constant 1 : index
    %c2048_33 = arith.constant 2048 : index
    %61 = vector.load %arg2[%c1_32, %c2048_33] : memref<2x4096xf32, #tpu.memory_space<vmem>>, vector<1x512xf32>
    %62 = vector.broadcast %61 : vector<1x512xf32> to vector<8x512xf32>
    %63 = arith.mulf %54, %62 : vector<8x512xf32>
    %cst_34 = arith.constant dense<0.000000e+00> : vector<8xf32>
    %64 = vector.multi_reduction <add>, %63, %cst_34 [1] : vector<8x512xf32> to vector<8xf32>
    %65 = vector.shape_cast %64 : vector<8xf32> to vector<8x1xf32>
    %66 = arith.addf %53, %65 : vector<8x1xf32>
    %c0_35 = arith.constant 0 : index
    %c2560 = arith.constant 2560 : index
    %67 = vector.load %arg1[%c0_35, %c2560] : memref<8x4096xf32, #tpu.memory_space<vmem>>, vector<8x512xf32>
    %c0_36 = arith.constant 0 : index
    %c2560_37 = arith.constant 2560 : index
    %68 = vector.load %arg2[%c0_36, %c2560_37] : memref<2x4096xf32, #tpu.memory_space<vmem>>, vector<1x512xf32>
    %69 = vector.broadcast %68 : vector<1x512xf32> to vector<8x512xf32>
    %70 = arith.mulf %67, %69 : vector<8x512xf32>
    %cst_38 = arith.constant dense<0.000000e+00> : vector<8xf32>
    %71 = vector.multi_reduction <add>, %70, %cst_38 [1] : vector<8x512xf32> to vector<8xf32>
    %72 = vector.shape_cast %71 : vector<8xf32> to vector<8x1xf32>
    %73 = arith.addf %60, %72 : vector<8x1xf32>
    %c1_39 = arith.constant 1 : index
    %c2560_40 = arith.constant 2560 : index
    %74 = vector.load %arg2[%c1_39, %c2560_40] : memref<2x4096xf32, #tpu.memory_space<vmem>>, vector<1x512xf32>
    %75 = vector.broadcast %74 : vector<1x512xf32> to vector<8x512xf32>
    %76 = arith.mulf %67, %75 : vector<8x512xf32>
    %cst_41 = arith.constant dense<0.000000e+00> : vector<8xf32>
    %77 = vector.multi_reduction <add>, %76, %cst_41 [1] : vector<8x512xf32> to vector<8xf32>
    %78 = vector.shape_cast %77 : vector<8xf32> to vector<8x1xf32>
    %79 = arith.addf %66, %78 : vector<8x1xf32>
    %c0_42 = arith.constant 0 : index
    %c3072 = arith.constant 3072 : index
    %80 = vector.load %arg1[%c0_42, %c3072] : memref<8x4096xf32, #tpu.memory_space<vmem>>, vector<8x512xf32>
    %c0_43 = arith.constant 0 : index
    %c3072_44 = arith.constant 3072 : index
    %81 = vector.load %arg2[%c0_43, %c3072_44] : memref<2x4096xf32, #tpu.memory_space<vmem>>, vector<1x512xf32>
    %82 = vector.broadcast %81 : vector<1x512xf32> to vector<8x512xf32>
    %83 = arith.mulf %80, %82 : vector<8x512xf32>
    %cst_45 = arith.constant dense<0.000000e+00> : vector<8xf32>
    %84 = vector.multi_reduction <add>, %83, %cst_45 [1] : vector<8x512xf32> to vector<8xf32>
    %85 = vector.shape_cast %84 : vector<8xf32> to vector<8x1xf32>
    %86 = arith.addf %73, %85 : vector<8x1xf32>
    %c1_46 = arith.constant 1 : index
    %c3072_47 = arith.constant 3072 : index
    %87 = vector.load %arg2[%c1_46, %c3072_47] : memref<2x4096xf32, #tpu.memory_space<vmem>>, vector<1x512xf32>
    %88 = vector.broadcast %87 : vector<1x512xf32> to vector<8x512xf32>
    %89 = arith.mulf %80, %88 : vector<8x512xf32>
    %cst_48 = arith.constant dense<0.000000e+00> : vector<8xf32>
    %90 = vector.multi_reduction <add>, %89, %cst_48 [1] : vector<8x512xf32> to vector<8xf32>
    %91 = vector.shape_cast %90 : vector<8xf32> to vector<8x1xf32>
    %92 = arith.addf %79, %91 : vector<8x1xf32>
    %c0_49 = arith.constant 0 : index
    %c3584 = arith.constant 3584 : index
    %93 = vector.load %arg1[%c0_49, %c3584] : memref<8x4096xf32, #tpu.memory_space<vmem>>, vector<8x512xf32>
    %c0_50 = arith.constant 0 : index
    %c3584_51 = arith.constant 3584 : index
    %94 = vector.load %arg2[%c0_50, %c3584_51] : memref<2x4096xf32, #tpu.memory_space<vmem>>, vector<1x512xf32>
    %95 = vector.broadcast %94 : vector<1x512xf32> to vector<8x512xf32>
    %96 = arith.mulf %93, %95 : vector<8x512xf32>
    %cst_52 = arith.constant dense<0.000000e+00> : vector<8xf32>
    %97 = vector.multi_reduction <add>, %96, %cst_52 [1] : vector<8x512xf32> to vector<8xf32>
    %98 = vector.shape_cast %97 : vector<8xf32> to vector<8x1xf32>
    %99 = arith.addf %86, %98 : vector<8x1xf32>
    %c1_53 = arith.constant 1 : index
    %c3584_54 = arith.constant 3584 : index
    %100 = vector.load %arg2[%c1_53, %c3584_54] : memref<2x4096xf32, #tpu.memory_space<vmem>>, vector<1x512xf32>
    %101 = vector.broadcast %100 : vector<1x512xf32> to vector<8x512xf32>
    %102 = arith.mulf %93, %101 : vector<8x512xf32>
    %cst_55 = arith.constant dense<0.000000e+00> : vector<8xf32>
    %103 = vector.multi_reduction <add>, %102, %cst_55 [1] : vector<8x512xf32> to vector<8xf32>
    %104 = vector.shape_cast %103 : vector<8xf32> to vector<8x1xf32>
    %105 = arith.addf %92, %104 : vector<8x1xf32>
    %c0_56 = arith.constant 0 : index
    %106 = memref.load %arg3[%c0_56] : memref<2xf32, #tpu.memory_space<smem>>
    %107 = vector.broadcast %106 : f32 to vector<8x1xf32>
    %108 = arith.addf %99, %107 : vector<8x1xf32>
    %c0_57 = arith.constant 0 : index
    %c0_58 = arith.constant 0 : index
    %109 = vector.load %arg4[%c0_57, %c0_58] : memref<8x2xf32, #tpu.memory_space<vmem>>, vector<8x1xf32>
    tpu.vector_store %arg4[%c0_57, %c0_58], %108 {strides = array<i32>} : memref<8x2xf32, #tpu.memory_space<vmem>>, vector<8x1xf32>,
    %c1_59 = arith.constant 1 : index
    %110 = memref.load %arg3[%c1_59] : memref<2xf32, #tpu.memory_space<smem>>
    %111 = vector.broadcast %110 : f32 to vector<8x1xf32>
    %112 = arith.addf %105, %111 : vector<8x1xf32>
    %c0_60 = arith.constant 0 : index
    %c1_61 = arith.constant 1 : index
    %113 = vector.load %arg4[%c0_60, %c1_61] : memref<8x2xf32, #tpu.memory_space<vmem>>, vector<8x1xf32>
    tpu.vector_store %arg4[%c0_60, %c1_61], %112 {strides = array<i32>} : memref<8x2xf32, #tpu.memory_space<vmem>>, vector<8x1xf32>,
    return
  }
  func.func @transform_0(%arg0: i32) -> (i32, i32) {
    %c0_i32 = arith.constant 0 : i32
    %c0_i32_0 = arith.constant 0 : i32
    return %arg0, %c0_i32 : i32, i32
  }
  func.func @transform_1(%arg0: i32) -> (i32, i32) {
    %c0_i32 = arith.constant 0 : i32
    %c0_i32_0 = arith.constant 0 : i32
    %c0_i32_1 = arith.constant 0 : i32
    return %c0_i32, %c0_i32_0 : i32, i32
  }
  func.func @transform_2(%arg0: i32) -> i32 {
    %c0_i32 = arith.constant 0 : i32
    %c0_i32_0 = arith.constant 0 : i32
    return %c0_i32 : i32
  }
  func.func @transform_3(%arg0: i32) -> (i32, i32) {
    %c0_i32 = arith.constant 0 : i32
    %c0_i32_0 = arith.constant 0 : i32
    return %arg0, %c0_i32 : i32, i32
  }
}

</mosaic_0001>

<llo_original>
// kernel: tpu_custom_call.1
$region0: #{tpu_custom_call.1}
  #allocation0 [shape = 'u32[]', space=smem, size = 0x4, offset = 0x4, fixed_abs, tag = 'smem constant byte address 0x4 - core index']
  #allocation1 [shape = 'u32[144,128]{1,0:T(1,128)}', space=vmem, size = 0x12000, scoped, tag = 'internal scratch']
  %s0 = inlined_call_operand.hbm [shape: f32[8,4096], index: 0, kind: input, shape index: {}]
  %s1 = inlined_call_operand.hbm [shape: f32[2,4096], index: 1, kind: input, shape index: {}]
  %s2 = inlined_call_operand.vmem [shape: f32[2], index: 2, kind: input, shape index: {}]
  %s3 = inlined_call_operand.vmem [shape: f32[8,2], index: 3, kind: output, shape index: {}]
  %s4 = sld [smem:[#allocation0]]
  $region34: #{tpu_custom_call.1} parent=0
    _
  %s6 = ssub.s32 1, %s4
  %s7 = scalar_select 0, %s6, %s4
  $region1: #{tpu_custom_call.1} parent=0
    #allocation2 [shape = 'u8[131072]{0}', space=vmem, size = 0x20000, scoped, tag = 'input window, operand 0, single buffered']
    #allocation3 [shape = 's32[1]{0}', space=sflag, size = 0x4, scoped, tag = 'scoped memory for tpu_custom_call.1']
    #allocation4 [shape = 's32[1]{0}', space=sflag, size = 0x4, scoped, tag = 'scoped memory for tpu_custom_call.1']
    #allocation5 [shape = 'u8[32768]{0}', space=vmem, size = 0x8000, scoped, tag = 'input window, operand 1, single buffered']
    #allocation6 [shape = 's32[1]{0}', space=sflag, size = 0x4, scoped, tag = 'scoped memory for tpu_custom_call.1']
    #allocation7 [shape = 'u8[512]{0}', space=smem, size = 0x200, scoped, tag = 'input window, operand 2, single buffered']
    %8 = vsyncpa [#allocation3], 0
    %9 = vsyncpa [#allocation6], 0
    %10 = vsyncpa [#allocation4], 0
    // Predicated region
    $region2: #{tpu_custom_call.1} parent=1 // pred_check
      _
    $region3: #{tpu_custom_call.1} parent=1 // pred_check_branch
      %12 = sbr.rel (0) target = $region5
    $region4: #{tpu_custom_call.1} parent=1 // pred_region
      %s14 = ssub.s32 4096, 4096
      %15 = vsyncadd [#allocation3], %s14
      %s17 = sshll.u32 [#allocation2], 4
      %s18 = int_to_ptr.vmem [resolvable:$true] %s17
      %20 = dma.hbm_to_vmem [thread:$0]  %s0, 4096, %s18, [#allocation3]
    $region5: #{tpu_custom_call.1} parent=1 // pred_fallthru
      _
    // Predicated region
    $region6: #{tpu_custom_call.1} parent=1 // pred_check
      _
    $region7: #{tpu_custom_call.1} parent=1 // pred_check_branch
      %22 = sbr.rel (0) target = $region9
    $region8: #{tpu_custom_call.1} parent=1 // pred_region
      %s24 = ssub.s32 1024, 1024
      %25 = vsyncadd [#allocation6], %s24
      %s27 = sshll.u32 [#allocation5], 4
      %s28 = int_to_ptr.vmem [resolvable:$true] %s27
      %30 = dma.hbm_to_vmem [thread:$0]  %s1, 1024, %s28, [#allocation6]
    $region9: #{tpu_custom_call.1} parent=1 // pred_fallthru
      _
    // Predicated region
    $region10: #{tpu_custom_call.1} parent=1 // pred_check
      _
    $region11: #{tpu_custom_call.1} parent=1 // pred_check_branch
      %32 = sbr.rel (0) target = $region13
    $region12: #{tpu_custom_call.1} parent=1 // pred_region
      %s34 = ssub.s32 16, 16
      %35 = vsyncadd [#allocation4], %s34
      %s37 = sshll.u32 %s2, 4
      %s38 = int_to_ptr.vmem [resolvable:$true] %s37
      %40 = dma.vmem_to_smem %s38, 16, [#allocation7], [#allocation4]
    $region13: #{tpu_custom_call.1} parent=1 // pred_fallthru
      _
    // Predicated region
    $region14: #{tpu_custom_call.1} parent=1 // pred_check
      _
    $region15: #{tpu_custom_call.1} parent=1 // pred_check_branch
      %42 = sbr.rel (0) target = $region17
    $region16: #{tpu_custom_call.1} parent=1 // pred_region
      %43 = dma.done [#allocation3], 4096
    $region17: #{tpu_custom_call.1} parent=1 // pred_fallthru
      _
    // Predicated region
    $region18: #{tpu_custom_call.1} parent=1 // pred_check
      _
    $region19: #{tpu_custom_call.1} parent=1 // pred_check_branch
      %45 = sbr.rel (0) target = $region21
    $region20: #{tpu_custom_call.1} parent=1 // pred_region
      %46 = dma.done [#allocation6], 1024
    $region21: #{tpu_custom_call.1} parent=1 // pred_fallthru
      _
    // Predicated region
    $region22: #{tpu_custom_call.1} parent=1 // pred_check
      _
    $region23: #{tpu_custom_call.1} parent=1 // pred_check_branch
      %48 = sbr.rel (0) target = $region25
    $region24: #{tpu_custom_call.1} parent=1 // pred_region
      %49 = dma.done [#allocation4], 16
    $region25: #{tpu_custom_call.1} parent=1 // pred_fallthru
      _
    %50 = sfence
    %v51 = vld [vmem:[#allocation2] sm:$0xff]
    %v52 = vld [vmem:[#allocation2 + $0x8] sm:$0xff]
    %v53 = vld [vmem:[#allocation2 + $0x10] sm:$0xff]
    %v54 = vld [vmem:[#allocation2 + $0x18] sm:$0xff]
    %v55 = vld [vmem:[#allocation5] ss:$2 sm:$0xf]
    %v57 = vlaneseq
    %v58 = vshrl.u32 %v57, 7
    %v59 = vsub.s32 0, %v58
    %v60 = vrot.slane %v55, %v59
    %v61 = vlaneseq
    %v62 = vshrl.u32 %v61, 7
    %v63 = vsub.s32 1, %v62
    %v64 = vrot.slane %v55, %v63
    %v65 = vlaneseq
    %v66 = vshrl.u32 %v65, 7
    %v67 = vsub.s32 2, %v66
    %v68 = vrot.slane %v55, %v67
    %v69 = vlaneseq
    %v70 = vshrl.u32 %v69, 7
    %v71 = vsub.s32 3, %v70
    %v72 = vrot.slane %v55, %v71
    %v77 = vmul.f32 %v51, %v60
    %v78 = vmul.f32 %v52, %v64
    %v79 = vmul.f32 %v53, %v68
    %v80 = vmul.f32 %v54, %v72
    %v81 = vadd.f32 %v77, %v78
    %v82 = vadd.f32 %v81, %v79
    %v83 = vadd.f32 %v82, %v80
    %84 = vadd.xlane.f32.xlu0 %v83
    %v85 = vpop.xlane.xlu0 %84
    %v86 = vadd.f32 %v85, 0.0
    %s87 = scalar_lea.vmem [#allocation5], 1
    %v88 = vld [vmem:[%s87] ss:$2 sm:$0xf]
    %v90 = vlaneseq
    %v91 = vshrl.u32 %v90, 7
    %v92 = vsub.s32 0, %v91
    %v93 = vrot.slane %v88, %v92
    %v94 = vlaneseq
    %v95 = vshrl.u32 %v94, 7
    %v96 = vsub.s32 1, %v95
    %v97 = vrot.slane %v88, %v96
    %v98 = vlaneseq
    %v99 = vshrl.u32 %v98, 7
    %v100 = vsub.s32 2, %v99
    %v101 = vrot.slane %v88, %v100
    %v102 = vlaneseq
    %v103 = vshrl.u32 %v102, 7
    %v104 = vsub.s32 3, %v103
    %v105 = vrot.slane %v88, %v104
    %v110 = vmul.f32 %v51, %v93
    %v111 = vmul.f32 %v52, %v97
    %v112 = vmul.f32 %v53, %v101
    %v113 = vmul.f32 %v54, %v105
    %v114 = vadd.f32 %v110, %v111
    %v115 = vadd.f32 %v114, %v112
    %v116 = vadd.f32 %v115, %v113
    %117 = vadd.xlane.f32.xlu0 %v116
    %v118 = vpop.xlane.xlu0 %117
    %v119 = vadd.f32 %v118, 0.0
    %v120 = vld [vmem:[#allocation2 + $0x20] sm:$0xff]
    %v121 = vld [vmem:[#allocation2 + $0x28] sm:$0xff]
    %v122 = vld [vmem:[#allocation2 + $0x30] sm:$0xff]
    %v123 = vld [vmem:[#allocation2 + $0x38] sm:$0xff]
    %s124 = scalar_lea.vmem [#allocation5], 8
    %v125 = vld [vmem:[%s124] ss:$2 sm:$0xf]
    %v127 = vlaneseq
    %v128 = vshrl.u32 %v127, 7
    %v129 = vsub.s32 0, %v128
    %v130 = vrot.slane %v125, %v129
    %v131 = vlaneseq
    %v132 = vshrl.u32 %v131, 7
    %v133 = vsub.s32 1, %v132
    %v134 = vrot.slane %v125, %v133
    %v135 = vlaneseq
    %v136 = vshrl.u32 %v135, 7
    %v137 = vsub.s32 2, %v136
    %v138 = vrot.slane %v125, %v137
    %v139 = vlaneseq
    %v140 = vshrl.u32 %v139, 7
    %v141 = vsub.s32 3, %v140
    %v142 = vrot.slane %v125, %v141
    %v147 = vmul.f32 %v120, %v130
    %v148 = vmul.f32 %v121, %v134
    %v149 = vmul.f32 %v122, %v138
    %v150 = vmul.f32 %v123, %v142
    %v151 = vadd.f32 %v147, %v148
    %v152 = vadd.f32 %v151, %v149
    %v153 = vadd.f32 %v152, %v150
    %154 = vadd.xlane.f32.xlu0 %v153
    %v155 = vpop.xlane.xlu0 %154
    %v156 = vadd.f32 %v86, %v155
    %s157 = scalar_lea.vmem [#allocation5], 9
    %v158 = vld [vmem:[%s157] ss:$2 sm:$0xf]
    %v160 = vlaneseq
    %v161 = vshrl.u32 %v160, 7
    %v162 = vsub.s32 0, %v161
    %v163 = vrot.slane %v158, %v162
    %v164 = vlaneseq
    %v165 = vshrl.u32 %v164, 7
    %v166 = vsub.s32 1, %v165
    %v167 = vrot.slane %v158, %v166
    %v168 = vlaneseq
    %v169 = vshrl.u32 %v168, 7
    %v170 = vsub.s32 2, %v169
    %v171 = vrot.slane %v158, %v170
    %v172 = vlaneseq
    %v173 = vshrl.u32 %v172, 7
    %v174 = vsub.s32 3, %v173
    %v175 = vrot.slane %v158, %v174
    %v180 = vmul.f32 %v120, %v163
    %v181 = vmul.f32 %v121, %v167
    %v182 = vmul.f32 %v122, %v171
    %v183 = vmul.f32 %v123, %v175
    %v184 = vadd.f32 %v180, %v181
    %v185 = vadd.f32 %v184, %v182
    %v186 = vadd.f32 %v185, %v183
    %187 = vadd.xlane.f32.xlu0 %v186
    %v188 = vpop.xlane.xlu0 %187
    %v189 = vadd.f32 %v119, %v188
    %v190 = vld [vmem:[#allocation2 + $0x40] sm:$0xff]
    %v191 = vld [vmem:[#allocation2 + $0x48] sm:$0xff]
    %v192 = vld [vmem:[#allocation2 + $0x50] sm:$0xff]
    %v193 = vld [vmem:[#allocation2 + $0x58] sm:$0xff]
    %s194 = scalar_lea.vmem [#allocation5], 16
    %v195 = vld [vmem:[%s194] ss:$2 sm:$0xf]
    %v197 = vlaneseq
    %v198 = vshrl.u32 %v197, 7
    %v199 = vsub.s32 0, %v198
    %v200 = vrot.slane %v195, %v199
    %v201 = vlaneseq
    %v202 = vshrl.u32 %v201, 7
    %v203 = vsub.s32 1, %v202
    %v204 = vrot.slane %v195, %v203
    %v205 = vlaneseq
    %v206 = vshrl.u32 %v205, 7
    %v207 = vsub.s32 2, %v206
    %v208 = vrot.slane %v195, %v207
    %v209 = vlaneseq
    %v210 = vshrl.u32 %v209, 7
    %v211 = vsub.s32 3, %v210
    %v212 = vrot.slane %v195, %v211
    %v217 = vmul.f32 %v190, %v200
    %v218 = vmul.f32 %v191, %v204
    %v219 = vmul.f32 %v192, %v208
    %v220 = vmul.f32 %v193, %v212
    %v221 = vadd.f32 %v217, %v218
    %v222 = vadd.f32 %v221, %v219
    %v223 = vadd.f32 %v222, %v220
    %224 = vadd.xlane.f32.xlu0 %v223
    %v225 = vpop.xlane.xlu0 %224
    %v226 = vadd.f32 %v156, %v225
    %s227 = scalar_lea.vmem [#allocation5], 17
    %v228 = vld [vmem:[%s227] ss:$2 sm:$0xf]
    %v230 = vlaneseq
    %v231 = vshrl.u32 %v230, 7
    %v232 = vsub.s32 0, %v231
    %v233 = vrot.slane %v228, %v232
    %v234 = vlaneseq
    %v235 = vshrl.u32 %v234, 7
    %v236 = vsub.s32 1, %v235
    %v237 = vrot.slane %v228, %v236
    %v238 = vlaneseq
    %v239 = vshrl.u32 %v238, 7
    %v240 = vsub.s32 2, %v239
    %v241 = vrot.slane %v228, %v240
    %v242 = vlaneseq
    %v243 = vshrl.u32 %v242, 7
    %v244 = vsub.s32 3, %v243
    %v245 = vrot.slane %v228, %v244
    %v250 = vmul.f32 %v190, %v233
    %v251 = vmul.f32 %v191, %v237
    %v252 = vmul.f32 %v192, %v241
    %v253 = vmul.f32 %v193, %v245
    %v254 = vadd.f32 %v250, %v251
    %v255 = vadd.f32 %v254, %v252
    %v256 = vadd.f32 %v255, %v253
    %257 = vadd.xlane.f32.xlu0 %v256
    %v258 = vpop.xlane.xlu0 %257
    %v259 = vadd.f32 %v189, %v258
    %v260 = vld [vmem:[#allocation2 + $0x60] sm:$0xff]
    %v261 = vld [vmem:[#allocation2 + $0x68] sm:$0xff]
    %v262 = vld [vmem:[#allocation2 + $0x70] sm:$0xff]
    %v263 = vld [vmem:[#allocation2 + $0x78] sm:$0xff]
    %s264 = scalar_lea.vmem [#allocation5], 24
    %v265 = vld [vmem:[%s264] ss:$2 sm:$0xf]
    %v267 = vlaneseq
    %v268 = vshrl.u32 %v267, 7
    %v269 = vsub.s32 0, %v268
    %v270 = vrot.slane %v265, %v269
    %v271 = vlaneseq
    %v272 = vshrl.u32 %v271, 7
    %v273 = vsub.s32 1, %v272
    %v274 = vrot.slane %v265, %v273
    %v275 = vlaneseq
    %v276 = vshrl.u32 %v275, 7
    %v277 = vsub.s32 2, %v276
    %v278 = vrot.slane %v265, %v277
    %v279 = vlaneseq
    %v280 = vshrl.u32 %v279, 7
    %v281 = vsub.s32 3, %v280
    %v282 = vrot.slane %v265, %v281
    %v287 = vmul.f32 %v260, %v270
    %v288 = vmul.f32 %v261, %v274
    %v289 = vmul.f32 %v262, %v278
    %v290 = vmul.f32 %v263, %v282
    %v291 = vadd.f32 %v287, %v288
    %v292 = vadd.f32 %v291, %v289
    %v293 = vadd.f32 %v292, %v290
    %294 = vadd.xlane.f32.xlu0 %v293
    %v295 = vpop.xlane.xlu0 %294
    %v296 = vadd.f32 %v226, %v295
    %s297 = scalar_lea.vmem [#allocation5], 25
    %v298 = vld [vmem:[%s297] ss:$2 sm:$0xf]
    %v300 = vlaneseq
    %v301 = vshrl.u32 %v300, 7
    %v302 = vsub.s32 0, %v301
    %v303 = vrot.slane %v298, %v302
    %v304 = vlaneseq
    %v305 = vshrl.u32 %v304, 7
    %v306 = vsub.s32 1, %v305
    %v307 = vrot.slane %v298, %v306
    %v308 = vlaneseq
    %v309 = vshrl.u32 %v308, 7
    %v310 = vsub.s32 2, %v309
    %v311 = vrot.slane %v298, %v310
    %v312 = vlaneseq
    %v313 = vshrl.u32 %v312, 7
    %v314 = vsub.s32 3, %v313
    %v315 = vrot.slane %v298, %v314
    %v320 = vmul.f32 %v260, %v303
    %v321 = vmul.f32 %v261, %v307
    %v322 = vmul.f32 %v262, %v311
    %v323 = vmul.f32 %v263, %v315
    %v324 = vadd.f32 %v320, %v321
    %v325 = vadd.f32 %v324, %v322
    %v326 = vadd.f32 %v325, %v323
    %327 = vadd.xlane.f32.xlu0 %v326
    %v328 = vpop.xlane.xlu0 %327
    %v329 = vadd.f32 %v259, %v328
    %v330 = vld [vmem:[#allocation2 + $0x80] sm:$0xff]
    %v331 = vld [vmem:[#allocation2 + $0x88] sm:$0xff]
    %v332 = vld [vmem:[#allocation2 + $0x90] sm:$0xff]
    %v333 = vld [vmem:[#allocation2 + $0x98] sm:$0xff]
    %s334 = scalar_lea.vmem [#allocation5], 32
    %v335 = vld [vmem:[%s334] ss:$2 sm:$0xf]
    %v337 = vlaneseq
    %v338 = vshrl.u32 %v337, 7
    %v339 = vsub.s32 0, %v338
    %v340 = vrot.slane %v335, %v339
    %v341 = vlaneseq
    %v342 = vshrl.u32 %v341, 7
    %v343 = vsub.s32 1, %v342
    %v344 = vrot.slane %v335, %v343
    %v345 = vlaneseq
    %v346 = vshrl.u32 %v345, 7
    %v347 = vsub.s32 2, %v346
    %v348 = vrot.slane %v335, %v347
    %v349 = vlaneseq
    %v350 = vshrl.u32 %v349, 7
    %v351 = vsub.s32 3, %v350
    %v352 = vrot.slane %v335, %v351
    %v357 = vmul.f32 %v330, %v340
    %v358 = vmul.f32 %v331, %v344
    %v359 = vmul.f32 %v332, %v348
    %v360 = vmul.f32 %v333, %v352
    %v361 = vadd.f32 %v357, %v358
    %v362 = vadd.f32 %v361, %v359
    %v363 = vadd.f32 %v362, %v360
    %364 = vadd.xlane.f32.xlu0 %v363
    %v365 = vpop.xlane.xlu0 %364
    %v366 = vadd.f32 %v296, %v365
    %s367 = scalar_lea.vmem [#allocation5], 33
    %v368 = vld [vmem:[%s367] ss:$2 sm:$0xf]
    %v370 = vlaneseq
    %v371 = vshrl.u32 %v370, 7
    %v372 = vsub.s32 0, %v371
    %v373 = vrot.slane %v368, %v372
    %v374 = vlaneseq
    %v375 = vshrl.u32 %v374, 7
    %v376 = vsub.s32 1, %v375
    %v377 = vrot.slane %v368, %v376
    %v378 = vlaneseq
    %v379 = vshrl.u32 %v378, 7
    %v380 = vsub.s32 2, %v379
    %v381 = vrot.slane %v368, %v380
    %v382 = vlaneseq
    %v383 = vshrl.u32 %v382, 7
    %v384 = vsub.s32 3, %v383
    %v385 = vrot.slane %v368, %v384
    %v390 = vmul.f32 %v330, %v373
    %v391 = vmul.f32 %v331, %v377
    %v392 = vmul.f32 %v332, %v381
    %v393 = vmul.f32 %v333, %v385
    %v394 = vadd.f32 %v390, %v391
    %v395 = vadd.f32 %v394, %v392
    %v396 = vadd.f32 %v395, %v393
    %397 = vadd.xlane.f32.xlu0 %v396
    %v398 = vpop.xlane.xlu0 %397
    %v399 = vadd.f32 %v329, %v398
    %v400 = vld [vmem:[#allocation2 + $0xa0] sm:$0xff]
    %v401 = vld [vmem:[#allocation2 + $0xa8] sm:$0xff]
    %v402 = vld [vmem:[#allocation2 + $0xb0] sm:$0xff]
    %v403 = vld [vmem:[#allocation2 + $0xb8] sm:$0xff]
    %s404 = scalar_lea.vmem [#allocation5], 40
    %v405 = vld [vmem:[%s404] ss:$2 sm:$0xf]
    %v407 = vlaneseq
    %v408 = vshrl.u32 %v407, 7
    %v409 = vsub.s32 0, %v408
    %v410 = vrot.slane %v405, %v409
    %v411 = vlaneseq
    %v412 = vshrl.u32 %v411, 7
    %v413 = vsub.s32 1, %v412
    %v414 = vrot.slane %v405, %v413
    %v415 = vlaneseq
    %v416 = vshrl.u32 %v415, 7
    %v417 = vsub.s32 2, %v416
    %v418 = vrot.slane %v405, %v417
    %v419 = vlaneseq
    %v420 = vshrl.u32 %v419, 7
    %v421 = vsub.s32 3, %v420
    %v422 = vrot.slane %v405, %v421
    %v427 = vmul.f32 %v400, %v410
    %v428 = vmul.f32 %v401, %v414
    %v429 = vmul.f32 %v402, %v418
    %v430 = vmul.f32 %v403, %v422
    %v431 = vadd.f32 %v427, %v428
    %v432 = vadd.f32 %v431, %v429
    %v433 = vadd.f32 %v432, %v430
    %434 = vadd.xlane.f32.xlu0 %v433
    %v435 = vpop.xlane.xlu0 %434
    %v436 = vadd.f32 %v366, %v435
    %s437 = scalar_lea.vmem [#allocation5], 41
    %v438 = vld [vmem:[%s437] ss:$2 sm:$0xf]
    %v440 = vlaneseq
    %v441 = vshrl.u32 %v440, 7
    %v442 = vsub.s32 0, %v441
    %v443 = vrot.slane %v438, %v442
    %v444 = vlaneseq
    %v445 = vshrl.u32 %v444, 7
    %v446 = vsub.s32 1, %v445
    %v447 = vrot.slane %v438, %v446
    %v448 = vlaneseq
    %v449 = vshrl.u32 %v448, 7
    %v450 = vsub.s32 2, %v449
    %v451 = vrot.slane %v438, %v450
    %v452 = vlaneseq
    %v453 = vshrl.u32 %v452, 7
    %v454 = vsub.s32 3, %v453
    %v455 = vrot.slane %v438, %v454
    %v460 = vmul.f32 %v400, %v443
    %v461 = vmul.f32 %v401, %v447
    %v462 = vmul.f32 %v402, %v451
    %v463 = vmul.f32 %v403, %v455
    %v464 = vadd.f32 %v460, %v461
    %v465 = vadd.f32 %v464, %v462
    %v466 = vadd.f32 %v465, %v463
    %467 = vadd.xlane.f32.xlu0 %v466
    %v468 = vpop.xlane.xlu0 %467
    %v469 = vadd.f32 %v399, %v468
    %v470 = vld [vmem:[#allocation2 + $0xc0] sm:$0xff]
    %v471 = vld [vmem:[#allocation2 + $0xc8] sm:$0xff]
    %v472 = vld [vmem:[#allocation2 + $0xd0] sm:$0xff]
    %v473 = vld [vmem:[#allocation2 + $0xd8] sm:$0xff]
    %s474 = scalar_lea.vmem [#allocation5], 48
    %v475 = vld [vmem:[%s474] ss:$2 sm:$0xf]
    %v477 = vlaneseq
    %v478 = vshrl.u32 %v477, 7
    %v479 = vsub.s32 0, %v478
    %v480 = vrot.slane %v475, %v479
    %v481 = vlaneseq
    %v482 = vshrl.u32 %v481, 7
    %v483 = vsub.s32 1, %v482
    %v484 = vrot.slane %v475, %v483
    %v485 = vlaneseq
    %v486 = vshrl.u32 %v485, 7
    %v487 = vsub.s32 2, %v486
    %v488 = vrot.slane %v475, %v487
    %v489 = vlaneseq
    %v490 = vshrl.u32 %v489, 7
    %v491 = vsub.s32 3, %v490
    %v492 = vrot.slane %v475, %v491
    %v497 = vmul.f32 %v470, %v480
    %v498 = vmul.f32 %v471, %v484
    %v499 = vmul.f32 %v472, %v488
    %v500 = vmul.f32 %v473, %v492
    %v501 = vadd.f32 %v497, %v498
    %v502 = vadd.f32 %v501, %v499
    %v503 = vadd.f32 %v502, %v500
    %504 = vadd.xlane.f32.xlu0 %v503
    %v505 = vpop.xlane.xlu0 %504
    %v506 = vadd.f32 %v436, %v505
    %s507 = scalar_lea.vmem [#allocation5], 49
    %v508 = vld [vmem:[%s507] ss:$2 sm:$0xf]
    %v510 = vlaneseq
    %v511 = vshrl.u32 %v510, 7
    %v512 = vsub.s32 0, %v511
    %v513 = vrot.slane %v508, %v512
    %v514 = vlaneseq
    %v515 = vshrl.u32 %v514, 7
    %v516 = vsub.s32 1, %v515
    %v517 = vrot.slane %v508, %v516
    %v518 = vlaneseq
    %v519 = vshrl.u32 %v518, 7
    %v520 = vsub.s32 2, %v519
    %v521 = vrot.slane %v508, %v520
    %v522 = vlaneseq
    %v523 = vshrl.u32 %v522, 7
    %v524 = vsub.s32 3, %v523
    %v525 = vrot.slane %v508, %v524
    %v530 = vmul.f32 %v470, %v513
    %v531 = vmul.f32 %v471, %v517
    %v532 = vmul.f32 %v472, %v521
    %v533 = vmul.f32 %v473, %v525
    %v534 = vadd.f32 %v530, %v531
    %v535 = vadd.f32 %v534, %v532
    %v536 = vadd.f32 %v535, %v533
    %537 = vadd.xlane.f32.xlu0 %v536
    %v538 = vpop.xlane.xlu0 %537
    %v539 = vadd.f32 %v469, %v538
    %v540 = vld [vmem:[#allocation2 + $0xe0] sm:$0xff]
    %v541 = vld [vmem:[#allocation2 + $0xe8] sm:$0xff]
    %v542 = vld [vmem:[#allocation2 + $0xf0] sm:$0xff]
    %v543 = vld [vmem:[#allocation2 + $0xf8] sm:$0xff]
    %s544 = scalar_lea.vmem [#allocation5], 56
    %v545 = vld [vmem:[%s544] ss:$2 sm:$0xf]
    %v547 = vlaneseq
    %v548 = vshrl.u32 %v547, 7
    %v549 = vsub.s32 0, %v548
    %v550 = vrot.slane %v545, %v549
    %v551 = vlaneseq
    %v552 = vshrl.u32 %v551, 7
    %v553 = vsub.s32 1, %v552
    %v554 = vrot.slane %v545, %v553
    %v555 = vlaneseq
    %v556 = vshrl.u32 %v555, 7
    %v557 = vsub.s32 2, %v556
    %v558 = vrot.slane %v545, %v557
    %v559 = vlaneseq
    %v560 = vshrl.u32 %v559, 7
    %v561 = vsub.s32 3, %v560
    %v562 = vrot.slane %v545, %v561
    %v567 = vmul.f32 %v540, %v550
    %v568 = vmul.f32 %v541, %v554
    %v569 = vmul.f32 %v542, %v558
    %v570 = vmul.f32 %v543, %v562
    %v571 = vadd.f32 %v567, %v568
    %v572 = vadd.f32 %v571, %v569
    %v573 = vadd.f32 %v572, %v570
    %574 = vadd.xlane.f32.xlu0 %v573
    %v575 = vpop.xlane.xlu0 %574
    %v576 = vadd.f32 %v506, %v575
    %s577 = scalar_lea.vmem [#allocation5], 57
    %v578 = vld [vmem:[%s577] ss:$2 sm:$0xf]
    %v580 = vlaneseq
    %v581 = vshrl.u32 %v580, 7
    %v582 = vsub.s32 0, %v581
    %v583 = vrot.slane %v578, %v582
    %v584 = vlaneseq
    %v585 = vshrl.u32 %v584, 7
    %v586 = vsub.s32 1, %v585
    %v587 = vrot.slane %v578, %v586
    %v588 = vlaneseq
    %v589 = vshrl.u32 %v588, 7
    %v590 = vsub.s32 2, %v589
    %v591 = vrot.slane %v578, %v590
    %v592 = vlaneseq
    %v593 = vshrl.u32 %v592, 7
    %v594 = vsub.s32 3, %v593
    %v595 = vrot.slane %v578, %v594
    %v600 = vmul.f32 %v540, %v583
    %v601 = vmul.f32 %v541, %v587
    %v602 = vmul.f32 %v542, %v591
    %v603 = vmul.f32 %v543, %v595
    %v604 = vadd.f32 %v600, %v601
    %v605 = vadd.f32 %v604, %v602
    %v606 = vadd.f32 %v605, %v603
    %607 = vadd.xlane.f32.xlu0 %v606
    %v608 = vpop.xlane.xlu0 %607
    %v609 = vadd.f32 %v539, %v608
    %s610 = sld [smem:[#allocation7]]
    %v611 = vstv %s610
    %v612 = vadd.f32 %v576, %v611
    %vm613 = vcmask 7168
    %614 = vst.msk [vmem:[%s3] sm:$0xff] %vm613, %v612
    %s615 = sld [smem:[#allocation7 + $0x1]]
    %v616 = vstv %s615
    %v617 = vadd.f32 %v609, %v616
    %vm618 = vcmask 15368
    %619 = vst.msk [vmem:[%s3] sm:$0xff] %vm618, %v617
    // Predicated region
    $region26: #{tpu_custom_call.1} parent=1 // pred_check
      _
    $region27: #{tpu_custom_call.1} parent=1 // pred_check_branch
      %621 = sbr.rel (0) target = $region29
    $region28: #{tpu_custom_call.1} parent=1 // pred_region
      _
    $region29: #{tpu_custom_call.1} parent=1 // pred_fallthru
      _
    // Predicated region
    $region30: #{tpu_custom_call.1} parent=1 // pred_check
      _
    $region31: #{tpu_custom_call.1} parent=1 // pred_check_branch
      %623 = sbr.rel (0) target = $region33
    $region32: #{tpu_custom_call.1} parent=1 // pred_region
      _
    $region33: #{tpu_custom_call.1} parent=1 // pred_fallthru
      _
    %624 = vsyncpa [#allocation3], 1
    %625 = vsyncpa [#allocation6], 1
    %626 = vsyncpa [#allocation4], 1

</llo_original>
